<compile_context>
chip_gen: v6e
topology: v6e:2x2x1
jax: 0.10.0
libtpu: 0.0.40
codegen_flags: <defaults>
</compile_context>

<pallas_src>
import functools

import jax
import jax.numpy as jnp
from jax.experimental import pallas as pl
from jax.experimental.pallas import tpu as pltpu


def _round_up(n: int, m: int) -> int:
    return ((n + m - 1) // m) * m


def _tpu_generation():
    """(tensorcores_per_chip, VMEM budget for tiling, scoped-vmem cap)."""
    try:
        kind = jax.devices()[0].device_kind.lower()
    except Exception:  # pragma: no cover - detection is best-effort only
        kind = ""
    if "7" in kind:                       # v7x: 2 TCs, 64 MiB VMEM per TC
        return 2, 40 * 1024 * 1024, 48 * 1024 * 1024
    # v5e / v6e: 1 TC, 128 MiB VMEM
    return 1, 80 * 1024 * 1024, 56 * 1024 * 1024


# --------------------------------------------------------------------------
# Kernel body: two MXU matmuls (f32 accumulation) + VPU bias-add / ReLU.
# --------------------------------------------------------------------------
def psy_mlp_kernel(x_ref, w1_ref, b1_ref, w2_ref, b2_ref, o_ref):
    x = x_ref[...].astype(w1_ref.dtype)          # cast to compute dtype in VMEM
    h = jnp.dot(x, w1_ref[...], preferred_element_type=jnp.float32) + b1_ref[...]
    h = jnp.maximum(h, 0.0)                      # ReLU in f32
    h = h.astype(w2_ref.dtype)                   # back to operand dtype
    y = jnp.dot(h, w2_ref[...], preferred_element_type=jnp.float32) + b2_ref[...]
    o_ref[...] = y.astype(o_ref.dtype)


# --------------------------------------------------------------------------
# One-time parameter preparation (cache the result as model state).
# --------------------------------------------------------------------------
def prepare_psy_params(w1, b1, w2, b2, *, use_bf16=True):
    """Transpose / pad / cast the PyTorch-layout weights once.

    w1: (out_size, in_size), b1: (out_size,)
    w2: (out_size, out_size), b2: (out_size,)
    """
    out_size, in_size = w1.shape
    assert w2.shape == (out_size, out_size)
    assert b1.shape == (out_size,) and b2.shape == (out_size,)

    compute_dtype = jnp.bfloat16 if use_bf16 else w1.dtype
    out_p = _round_up(out_size, 128)             # lane-dense output features

    w1t = w1.T.astype(compute_dtype)             # (in_size, out_size)
    w2t = w2.T.astype(compute_dtype)             # (out_size, out_size)
    if out_p != out_size:                        # pad only when misaligned
        w1_p = jnp.zeros((in_size, out_p), compute_dtype).at[:, :out_size].set(w1t)
        w2_p = jnp.zeros((out_p, out_p), compute_dtype).at[:out_size, :out_size].set(w2t)
        b1_p = jnp.zeros((1, out_p), jnp.float32).at[0, :out_size].set(
            b1.astype(jnp.float32))
        b2_p = jnp.zeros((1, out_p), jnp.float32).at[0, :out_size].set(
            b2.astype(jnp.float32))
    else:
        w1_p, w2_p = w1t, w2t
        b1_p = b1.astype(jnp.float32).reshape(1, out_p)
        b2_p = b2.astype(jnp.float32).reshape(1, out_p)

    return {"w1": w1_p, "b1": b1_p, "w2": w2_p, "b2": b2_p,
            "in_size": in_size, "out_size": out_size}


# --------------------------------------------------------------------------
# Forward pass.
# --------------------------------------------------------------------------
@functools.partial(jax.jit, static_argnames=("out_size", "tb", "out_dtype"))
def _psy_forward_impl(x, w1_p, b1_p, w2_p, b2_p, *, out_size, tb=None,
                      out_dtype=None):
    B, in_size = x.shape
    assert w1_p.shape[0] == in_size
    out_p = w1_p.shape[1]
    compute_dtype = jnp.dtype(w1_p.dtype)
    out_dtype = compute_dtype if out_dtype is None else jnp.dtype(out_dtype)

    xbytes = jnp.dtype(x.dtype).itemsize
    cbytes = compute_dtype.itemsize
    obytes = out_dtype.itemsize

    num_cores, tb_budget, vmem_cap = _tpu_generation()
    row_align = 16 if (compute_dtype == jnp.bfloat16
                       or out_dtype == jnp.bfloat16) else 8

    # ---- batch tile selection (generation aware) --------------------------
    if tb is None:
        # v7x: at least 2 grid steps so both TensorCores get work; v5e/v6e:
        # a single large tile (per-step overhead ~0.35us, big tiles ~85% of
        # the HBM roofline vs ~30% for small tiles).
        target_steps = max(num_cores, 1)
        tb = min(_round_up(pl.cdiv(B, target_steps), row_align), 1024)
    tb = _round_up(tb, row_align)

    # VMEM budget: resident (double-buffered) weights + biases, double-buffered
    # x / out tiles, f32 intermediate h (+ its compute-dtype copy).
    weight_bytes = 2 * (in_size * out_p + out_p * out_p) * cbytes + 4 * out_p * 4
    per_row_bytes = (2 * in_size * xbytes        # x tile, double-buffered
                     + 2 * out_p * obytes        # out tile, double-buffered
                     + out_p * 4                 # f32 intermediate h
                     + out_p * cbytes)           # h cast for second matmul
    while tb > row_align and weight_bytes + tb * per_row_bytes > tb_budget:
        tb = _round_up(tb // 2, row_align)

    B_p = _round_up(B, tb)
    grid = (B_p // tb,)

    # ---- input: no feature padding, no dtype cast; pad batch only if needed.
    if B_p != B:
        x_in = jnp.zeros((B_p, in_size), x.dtype).at[:B].set(x)
    else:
        x_in = x

    # ---- advisory cost estimate -------------------------------------------
    cost = pl.CostEstimate(
        flops=2 * B_p * in_size * out_p + 2 * B_p * out_p * out_p,
        transcendentals=0,
        bytes_accessed=(B_p * in_size * xbytes
                        + (in_size * out_p + out_p * out_p) * cbytes
                        + 2 * out_p * 4
                        + B_p * out_p * obytes),
    )

    cp_kwargs = dict(dimension_semantics=("parallel",))
    est_vmem = weight_bytes + tb * per_row_bytes
    if est_vmem > 16 * 1024 * 1024:
        cp_kwargs["vmem_limit_bytes"] = int(min(est_vmem * 2, vmem_cap))

    y_p = pl.pallas_call(
        psy_mlp_kernel,
        out_shape=jax.ShapeDtypeStruct((B_p, out_p), out_dtype),
        grid_spec=pltpu.PrefetchScalarGridSpec(
            num_scalar_prefetch=0,
            grid=grid,
            in_specs=[
                pl.BlockSpec((tb, in_size), lambda i: (i, 0)),      # x tile
                # Grid-invariant blocks: fetched once, kept resident.
                pl.BlockSpec((in_size, out_p), lambda i: (0, 0)),   # W1 (in,out_p)
                pl.BlockSpec((1, out_p), lambda i: (0, 0)),         # b1
                pl.BlockSpec((out_p, out_p), lambda i: (0, 0)),     # W2
                pl.BlockSpec((1, out_p), lambda i: (0, 0)),         # b2
            ],
            out_specs=pl.BlockSpec((tb, out_p), lambda i: (i, 0)),  # lane-dense out
        ),
        compiler_params=pltpu.CompilerParams(**cp_kwargs),
        cost_estimate=cost,
    )(x_in, w1_p, b1_p, w2_p, b2_p)

    if B_p != B or out_p != out_size:
        return y_p[:B, :out_size]
    return y_p


def psy_forward(x, params, *, tb=None, out_dtype=None):
    """Forward pass of Psy given params from `prepare_psy_params`."""
    if out_dtype is not None:
        out_dtype = jnp.dtype(out_dtype)
    return _psy_forward_impl(
        x, params["w1"], params["b1"], params["w2"], params["b2"],
        out_size=params["out_size"], tb=tb, out_dtype=out_dtype)


if __name__ == "__main__":
    # Small shapes consistent with the module: x (batch, in_size).
    B, in_size, out_size = 256, 32, 32

    key = jax.random.PRNGKey(0)
    kx, kw1, kb1, kw2, kb2 = jax.random.split(key, 5)

    x = jax.random.normal(kx, (B, in_size), dtype=jnp.float32)

    # PyTorch nn.Linear parameter layouts: weight (out, in), bias (out,).
    w1 = jax.random.normal(kw1, (out_size, in_size), dtype=jnp.float32) * 0.1
    b1 = jax.random.normal(kb1, (out_size,), dtype=jnp.float32) * 0.1
    w2 = jax.random.normal(kw2, (out_size, out_size), dtype=jnp.float32) * 0.1
    b2 = jax.random.normal(kb2, (out_size,), dtype=jnp.float32) * 0.1

    # Pure-JAX reference with exact PyTorch semantics.
    ref = jnp.maximum(x @ w1.T + b1, 0.0) @ w2.T + b2

    # Exact f32 path (module semantics), f32 output.
    params_f32 = prepare_psy_params(w1, b1, w2, b2, use_bf16=False)
    y = jax.block_until_ready(psy_forward(x, params_f32, out_dtype=jnp.float32))
    assert y.shape == (B, out_size)
    assert y.dtype == jnp.float32
    assert jnp.allclose(y, ref, atol=1e-5, rtol=1e-5), "f32 mismatch vs reference"

    # Default fast path: bf16 operands / bf16 output, f32 accumulation.
    params_bf16 = prepare_psy_params(w1, b1, w2, b2, use_bf16=True)
    y_bf16 = jax.block_until_ready(psy_forward(x, params_bf16))
    assert y_bf16.shape == (B, out_size)
    assert jnp.allclose(y_bf16.astype(jnp.float32), ref, atol=5e-2, rtol=5e-2), \
        "bf16 mismatch vs reference"

    print("KERNEL_OK")
</pallas_src>

<mosaic_0001>
module attributes {stable_mosaic.version = 11 : i64} {
  func.func @psy_mlp_kernel(%arg0: i32, %arg1: memref<256x32xf32, #tpu.memory_space<vmem>>, %arg2: memref<32x128xf32, #tpu.memory_space<vmem>>, %arg3: memref<1x128xf32, #tpu.memory_space<vmem>>, %arg4: memref<128x128xf32, #tpu.memory_space<vmem>>, %arg5: memref<1x128xf32, #tpu.memory_space<vmem>>, %arg6: memref<256x128xf32, #tpu.memory_space<vmem>>) attributes {dimension_semantics = [#tpu.dimension_semantics<parallel>], iteration_bounds = array<i64: 1>, scalar_prefetch = 0 : i64, scratch_operands = 0 : i64, tpu.core_type = #tpu.core_type<tc>, window_params = [{transform_indices = @transform_0, window_bounds = array<i64: 256, 32>}, {pipeline_mode = #tpu.pipeline_mode<synchronous>, transform_indices = @transform_1, window_bounds = array<i64: 32, 128>}, {pipeline_mode = #tpu.pipeline_mode<synchronous>, transform_indices = @transform_2, window_bounds = array<i64: 1, 128>}, {pipeline_mode = #tpu.pipeline_mode<synchronous>, transform_indices = @transform_3, window_bounds = array<i64: 128, 128>}, {pipeline_mode = #tpu.pipeline_mode<synchronous>, transform_indices = @transform_4, window_bounds = array<i64: 1, 128>}, {transform_indices = @transform_5, window_bounds = array<i64: 256, 128>}]} {
    %c0 = arith.constant 0 : index
    %c0_0 = arith.constant 0 : index
    %0 = vector.load %arg1[%c0, %c0_0] : memref<256x32xf32, #tpu.memory_space<vmem>>, vector<256x32xf32>
    %c0_1 = arith.constant 0 : index
    %c0_2 = arith.constant 0 : index
    %1 = vector.load %arg2[%c0_1, %c0_2] : memref<32x128xf32, #tpu.memory_space<vmem>>, vector<32x128xf32>
    %cst = arith.constant dense<0.000000e+00> : vector<256x128xf32>
    %2 = tpu.matmul %0, %1, %cst {dimension_numbers = #tpu.dot_dimension_numbers<[1], [0], [0], [1], [0, 0, 1, 1], [], []>} : vector<256x32xf32>, vector<32x128xf32>, vector<256x128xf32> -> vector<256x128xf32>
    %c0_3 = arith.constant 0 : index
    %c0_4 = arith.constant 0 : index
    %3 = vector.load %arg3[%c0_3, %c0_4] : memref<1x128xf32, #tpu.memory_space<vmem>>, vector<1x128xf32>
    %4 = vector.broadcast %3 : vector<1x128xf32> to vector<256x128xf32>
    %5 = arith.addf %2, %4 : vector<256x128xf32>
    %cst_5 = arith.constant 0.000000e+00 : f32
    %6 = vector.broadcast %cst_5 : f32 to vector<256x128xf32>
    %7 = arith.maximumf %5, %6 : vector<256x128xf32>
    %c0_6 = arith.constant 0 : index
    %c0_7 = arith.constant 0 : index
    %8 = vector.load %arg4[%c0_6, %c0_7] : memref<128x128xf32, #tpu.memory_space<vmem>>, vector<128x128xf32>
    %cst_8 = arith.constant dense<0.000000e+00> : vector<256x128xf32>
    %9 = tpu.matmul %7, %8, %cst_8 {dimension_numbers = #tpu.dot_dimension_numbers<[1], [0], [0], [1], [0, 0, 1, 1], [], []>} : vector<256x128xf32>, vector<128x128xf32>, vector<256x128xf32> -> vector<256x128xf32>
    %c0_9 = arith.constant 0 : index
    %c0_10 = arith.constant 0 : index
    %10 = vector.load %arg5[%c0_9, %c0_10] : memref<1x128xf32, #tpu.memory_space<vmem>>, vector<1x128xf32>
    %11 = vector.broadcast %10 : vector<1x128xf32> to vector<256x128xf32>
    %12 = arith.addf %9, %11 : vector<256x128xf32>
    %c0_11 = arith.constant 0 : index
    %c0_12 = arith.constant 0 : index
    %13 = vector.load %arg6[%c0_11, %c0_12] : memref<256x128xf32, #tpu.memory_space<vmem>>, vector<256x128xf32>
    tpu.vector_store %arg6[%c0_11, %c0_12], %12 {strides = array<i32>} : memref<256x128xf32, #tpu.memory_space<vmem>>, vector<256x128xf32>,
    return
  }
  func.func @transform_0(%arg0: i32) -> (i32, i32) {
    %c0_i32 = arith.constant 0 : i32
    %c0_i32_0 = arith.constant 0 : i32
    return %arg0, %c0_i32 : i32, i32
  }
  func.func @transform_1(%arg0: i32) -> (i32, i32) {
    %c0_i32 = arith.constant 0 : i32
    %c0_i32_0 = arith.constant 0 : i32
    %c0_i32_1 = arith.constant 0 : i32
    return %c0_i32, %c0_i32_0 : i32, i32
  }
  func.func @transform_2(%arg0: i32) -> (i32, i32) {
    %c0_i32 = arith.constant 0 : i32
    %c0_i32_0 = arith.constant 0 : i32
    %c0_i32_1 = arith.constant 0 : i32
    return %c0_i32, %c0_i32_0 : i32, i32
  }
  func.func @transform_3(%arg0: i32) -> (i32, i32) {
    %c0_i32 = arith.constant 0 : i32
    %c0_i32_0 = arith.constant 0 : i32
    %c0_i32_1 = arith.constant 0 : i32
    return %c0_i32, %c0_i32_0 : i32, i32
  }
  func.func @transform_4(%arg0: i32) -> (i32, i32) {
    %c0_i32 = arith.constant 0 : i32
    %c0_i32_0 = arith.constant 0 : i32
    %c0_i32_1 = arith.constant 0 : i32
    return %c0_i32, %c0_i32_0 : i32, i32
  }
  func.func @transform_5(%arg0: i32) -> (i32, i32) {
    %c0_i32 = arith.constant 0 : i32
    %c0_i32_0 = arith.constant 0 : i32
    return %arg0, %c0_i32 : i32, i32
  }
}

</mosaic_0001>

<llo_original>
// kernel: _psy_forward_impl.1
$region0: #{_psy_forward_impl.1}
  #allocation0 [shape = 'u32[]', space=smem, size = 0x4, offset = 0x4, fixed_abs, tag = 'smem constant byte address 0x4 - core index']
  #allocation1 [shape = 'u32[144,128]{1,0:T(1,128)}', space=vmem, size = 0x12000, scoped, tag = 'internal scratch']
  %s0 = inlined_call_operand.vmem [shape: f32[256,32], index: 0, kind: input, shape index: {}]
  %s1 = inlined_call_operand.vmem [shape: f32[32,128], index: 1, kind: input, shape index: {}]
  %s2 = inlined_call_operand.vmem [shape: f32[1,128], index: 2, kind: input, shape index: {}]
  %s3 = inlined_call_operand.vmem [shape: f32[128,128], index: 3, kind: input, shape index: {}]
  %s4 = inlined_call_operand.vmem [shape: f32[1,128], index: 4, kind: input, shape index: {}]
  %s5 = inlined_call_operand.vmem [shape: f32[256,128], index: 5, kind: output, shape index: {}]
  %s6 = sld [smem:[#allocation0]]
  $region30: #{_psy_forward_impl.1} parent=0
    _
  %s8 = ssub.s32 1, %s6
  %s9 = scalar_select 0, %s8, %s6
  // Predicated region
  $region2: #{_psy_forward_impl.1} parent=0 // pred_check
    _
  $region3: #{_psy_forward_impl.1} parent=0 // pred_check_branch
    %11 = sbr.rel (0) target = $region5
  $region4: #{_psy_forward_impl.1} parent=0 // pred_region
    _
  $region5: #{_psy_forward_impl.1} parent=0 // pred_fallthru
    _
  // Predicated region
  $region6: #{_psy_forward_impl.1} parent=0 // pred_check
    _
  $region7: #{_psy_forward_impl.1} parent=0 // pred_check_branch
    %13 = sbr.rel (0) target = $region9
  $region8: #{_psy_forward_impl.1} parent=0 // pred_region
    _
  $region9: #{_psy_forward_impl.1} parent=0 // pred_fallthru
    _
  // Predicated region
  $region10: #{_psy_forward_impl.1} parent=0 // pred_check
    _
  $region11: #{_psy_forward_impl.1} parent=0 // pred_check_branch
    %15 = sbr.rel (0) target = $region13
  $region12: #{_psy_forward_impl.1} parent=0 // pred_region
    _
  $region13: #{_psy_forward_impl.1} parent=0 // pred_fallthru
    _
  // Predicated region
  $region14: #{_psy_forward_impl.1} parent=0 // pred_check
    _
  $region15: #{_psy_forward_impl.1} parent=0 // pred_check_branch
    %17 = sbr.rel (0) target = $region17
  $region16: #{_psy_forward_impl.1} parent=0 // pred_region
    _
  $region17: #{_psy_forward_impl.1} parent=0 // pred_fallthru
    _
  // Predicated region
  $region18: #{_psy_forward_impl.1} parent=0 // pred_check
    _
  $region19: #{_psy_forward_impl.1} parent=0 // pred_check_branch
    %19 = sbr.rel (0) target = $region21
  $region20: #{_psy_forward_impl.1} parent=0 // pred_region
    _
  $region21: #{_psy_forward_impl.1} parent=0 // pred_fallthru
    _
  %v20 = vld [vmem:[%s0] sm:$0xff]
  %v21 = vld [vmem:[%s0 + $0x8] sm:$0xff]
  %v22 = vld [vmem:[%s0 + $0x10] sm:$0xff]
  %v23 = vld [vmem:[%s0 + $0x18] sm:$0xff]
  %v24 = vld [vmem:[%s0 + $0x20] sm:$0xff]
  %v25 = vld [vmem:[%s0 + $0x28] sm:$0xff]
  %v26 = vld [vmem:[%s0 + $0x30] sm:$0xff]
  %v27 = vld [vmem:[%s0 + $0x38] sm:$0xff]
  %v28 = vld [vmem:[%s0 + $0x40] sm:$0xff]
  %v29 = vld [vmem:[%s0 + $0x48] sm:$0xff]
  %v30 = vld [vmem:[%s0 + $0x50] sm:$0xff]
  %v31 = vld [vmem:[%s0 + $0x58] sm:$0xff]
  %v32 = vld [vmem:[%s0 + $0x60] sm:$0xff]
  %v33 = vld [vmem:[%s0 + $0x68] sm:$0xff]
  %v34 = vld [vmem:[%s0 + $0x70] sm:$0xff]
  %v35 = vld [vmem:[%s0 + $0x78] sm:$0xff]
  %v36 = vld [vmem:[%s0 + $0x80] sm:$0xff]
  %v37 = vld [vmem:[%s0 + $0x88] sm:$0xff]
  %v38 = vld [vmem:[%s0 + $0x90] sm:$0xff]
  %v39 = vld [vmem:[%s0 + $0x98] sm:$0xff]
  %v40 = vld [vmem:[%s0 + $0xa0] sm:$0xff]
  %v41 = vld [vmem:[%s0 + $0xa8] sm:$0xff]
  %v42 = vld [vmem:[%s0 + $0xb0] sm:$0xff]
  %v43 = vld [vmem:[%s0 + $0xb8] sm:$0xff]
  %v44 = vld [vmem:[%s0 + $0xc0] sm:$0xff]
  %v45 = vld [vmem:[%s0 + $0xc8] sm:$0xff]
  %v46 = vld [vmem:[%s0 + $0xd0] sm:$0xff]
  %v47 = vld [vmem:[%s0 + $0xd8] sm:$0xff]
  %v48 = vld [vmem:[%s0 + $0xe0] sm:$0xff]
  %v49 = vld [vmem:[%s0 + $0xe8] sm:$0xff]
  %v50 = vld [vmem:[%s0 + $0xf0] sm:$0xff]
  %v51 = vld [vmem:[%s0 + $0xf8] sm:$0xff]
  %v52 = vld [vmem:[%s1] sm:$0xff]
  %v53 = vld [vmem:[%s1 + $0x8] sm:$0xff]
  %v54 = vld [vmem:[%s1 + $0x10] sm:$0xff]
  %v55 = vld [vmem:[%s1 + $0x18] sm:$0xff]
  %v56 = vld [vmem:[%s2] sm:$0x1]
  %v58 = vlaneseq
  %v59 = vshrl.u32 %v58, 7
  %v60 = vsub.s32 0, %v59
  %v61 = vrot.slane %v56, %v60
  %vm63 = vcmask 261120
  %v65 = vsel %vm63, %v20, 0
  %v68 = vsel %vm63, %v21, 0
  %v71 = vsel %vm63, %v22, 0
  %v74 = vsel %vm63, %v23, 0
  %v77 = vsel %vm63, %v24, 0
  %v80 = vsel %vm63, %v25, 0
  %v83 = vsel %vm63, %v26, 0
  %v86 = vsel %vm63, %v27, 0
  %v89 = vsel %vm63, %v28, 0
  %v92 = vsel %vm63, %v29, 0
  %v95 = vsel %vm63, %v30, 0
  %v98 = vsel %vm63, %v31, 0
  %v101 = vsel %vm63, %v32, 0
  %v104 = vsel %vm63, %v33, 0
  %v107 = vsel %vm63, %v34, 0
  %v110 = vsel %vm63, %v35, 0
  %v113 = vsel %vm63, %v36, 0
  %v116 = vsel %vm63, %v37, 0
  %v119 = vsel %vm63, %v38, 0
  %v122 = vsel %vm63, %v39, 0
  %v125 = vsel %vm63, %v40, 0
  %v128 = vsel %vm63, %v41, 0
  %v131 = vsel %vm63, %v42, 0
  %v134 = vsel %vm63, %v43, 0
  %v137 = vsel %vm63, %v44, 0
  %v140 = vsel %vm63, %v45, 0
  %v143 = vsel %vm63, %v46, 0
  %v146 = vsel %vm63, %v47, 0
  %v149 = vsel %vm63, %v48, 0
  %v152 = vsel %vm63, %v49, 0
  %v155 = vsel %vm63, %v50, 0
  %v158 = vsel %vm63, %v51, 0
  %160 = vmatprep.subr.mxu0 0.0
  %161 = vmatpush1.msra.mxu0 0.0
  %162 = vmatprep.subr.mxu0 0.0
  %163 = vmatpush1.msra.mxu0 0.0
  %164 = vmatprep.subr.mxu0 0.0
  %165 = vmatpush1.msra.mxu0 0.0
  %166 = vmatprep.subr.mxu0 0.0
  %167 = vmatpush1.msra.mxu0 0.0
  %168 = vmatprep.subr.mxu0 0.0
  %169 = vmatpush1.msra.mxu0 0.0
  %170 = vmatprep.subr.mxu0 0.0
  %171 = vmatpush1.msra.mxu0 0.0
  %172 = vmatprep.subr.mxu0 0.0
  %173 = vmatpush1.msra.mxu0 0.0
  %174 = vmatprep.subr.mxu0 0.0
  %175 = vmatpush1.msra.mxu0 0.0
  %176 = vmatprep.subr.mxu0 0.0
  %177 = vmatpush1.msra.mxu0 0.0
  %178 = vmatprep.subr.mxu0 0.0
  %179 = vmatpush1.msra.mxu0 0.0
  %180 = vmatprep.subr.mxu0 0.0
  %181 = vmatpush1.msra.mxu0 0.0
  %182 = vmatprep.subr.mxu0 0.0
  %183 = vmatpush1.msra.mxu0 0.0
  %184 = vmatprep.subr.mxu0 0.0
  %185 = vmatpush1.msra.mxu0 %v55
  %186 = vmatprep.subr.mxu0 0.0
  %187 = vmatpush1.msra.mxu0 %v54
  %188 = vmatprep.subr.mxu0 0.0
  %189 = vmatpush1.msra.mxu0 %v53
  %190 = vmatprep.subr.mxu0 0.0
  %191 = vmatpush1.msra.mxu0 %v52
  %192 = vmatprep.subr.mxu0 0.0
  %193 = vmatpush2.msra.mxu0 0.0
  %194 = vmatprep.subr.mxu0 0.0
  %195 = vmatpush2.msra.mxu0 0.0
  %196 = vmatprep.subr.mxu0 0.0
  %197 = vmatpush2.msra.mxu0 0.0
  %198 = vmatprep.subr.mxu0 0.0
  %199 = vmatpush2.msra.mxu0 0.0
  %200 = vmatprep.subr.mxu0 0.0
  %201 = vmatpush2.msra.mxu0 0.0
  %202 = vmatprep.subr.mxu0 0.0
  %203 = vmatpush2.msra.mxu0 0.0
  %204 = vmatprep.subr.mxu0 0.0
  %205 = vmatpush2.msra.mxu0 0.0
  %206 = vmatprep.subr.mxu0 0.0
  %207 = vmatpush2.msra.mxu0 0.0
  %208 = vmatprep.subr.mxu0 0.0
  %209 = vmatpush2.msra.mxu0 0.0
  %210 = vmatprep.subr.mxu0 0.0
  %211 = vmatpush2.msra.mxu0 0.0
  %212 = vmatprep.subr.mxu0 0.0
  %213 = vmatpush2.msra.mxu0 0.0
  %214 = vmatprep.subr.mxu0 0.0
  %215 = vmatpush2.msra.mxu0 0.0
  %216 = vmatprep.subr.mxu0 0.0
  %217 = vmatpush2.msra.mxu0 0.0
  %218 = vmatprep.subr.mxu0 0.0
  %219 = vmatpush2.msra.mxu0 0.0
  %220 = vmatprep.subr.mxu0 0.0
  %221 = vmatpush2.msra.mxu0 0.0
  %222 = vmatprep.subr.mxu0 0.0
  %223 = vmatpush2.msra.mxu0 0.0
  %224 = vmatprep.mubr.f32.mxu0 0.0
  %225 = vmatmul.mubr.f32.gmra.mxu0 %v65
  %v226 = vpop.f32.mrf.mxu0
  %v227 = vadd.f32 %v61, %v226
  %v228 = vpop.f32.mrf.mxu0
  %229 = vmatprep.mubr.f32.mxu0 0.0
  %230 = vmatmul.mubr.f32.gmra.mxu0 %v68
  %v231 = vpop.f32.mrf.mxu0
  %v232 = vadd.f32 %v61, %v231
  %v233 = vpop.f32.mrf.mxu0
  %234 = vmatprep.mubr.f32.mxu0 0.0
  %235 = vmatmul.mubr.f32.gmra.mxu0 %v71
  %v236 = vpop.f32.mrf.mxu0
  %v237 = vadd.f32 %v61, %v236
  %v238 = vpop.f32.mrf.mxu0
  %239 = vmatprep.mubr.f32.mxu0 0.0
  %240 = vmatmul.mubr.f32.gmra.mxu0 %v74
  %v241 = vpop.f32.mrf.mxu0
  %v242 = vadd.f32 %v61, %v241
  %v243 = vpop.f32.mrf.mxu0
  %244 = vmatprep.mubr.f32.mxu0 0.0
  %245 = vmatmul.mubr.f32.gmra.mxu0 %v77
  %v246 = vpop.f32.mrf.mxu0
  %v247 = vadd.f32 %v61, %v246
  %v248 = vpop.f32.mrf.mxu0
  %249 = vmatprep.mubr.f32.mxu0 0.0
  %250 = vmatmul.mubr.f32.gmra.mxu0 %v80
  %v251 = vpop.f32.mrf.mxu0
  %v252 = vadd.f32 %v61, %v251
  %v253 = vpop.f32.mrf.mxu0
  %254 = vmatprep.mubr.f32.mxu0 0.0
  %255 = vmatmul.mubr.f32.gmra.mxu0 %v83
  %v256 = vpop.f32.mrf.mxu0
  %v257 = vadd.f32 %v61, %v256
  %v258 = vpop.f32.mrf.mxu0
  %259 = vmatprep.mubr.f32.mxu0 0.0
  %260 = vmatmul.mubr.f32.gmra.mxu0 %v86
  %v261 = vpop.f32.mrf.mxu0
  %v262 = vadd.f32 %v61, %v261
  %v263 = vpop.f32.mrf.mxu0
  %264 = vmatprep.mubr.f32.mxu0 0.0
  %265 = vmatmul.mubr.f32.gmra.mxu0 %v89
  %v266 = vpop.f32.mrf.mxu0
  %v267 = vadd.f32 %v61, %v266
  %v268 = vpop.f32.mrf.mxu0
  %269 = vmatprep.mubr.f32.mxu0 0.0
  %270 = vmatmul.mubr.f32.gmra.mxu0 %v92
  %v271 = vpop.f32.mrf.mxu0
  %v272 = vadd.f32 %v61, %v271
  %v273 = vpop.f32.mrf.mxu0
  %274 = vmatprep.mubr.f32.mxu0 0.0
  %275 = vmatmul.mubr.f32.gmra.mxu0 %v95
  %v276 = vpop.f32.mrf.mxu0
  %v277 = vadd.f32 %v61, %v276
  %v278 = vpop.f32.mrf.mxu0
  %279 = vmatprep.mubr.f32.mxu0 0.0
  %280 = vmatmul.mubr.f32.gmra.mxu0 %v98
  %v281 = vpop.f32.mrf.mxu0
  %v282 = vadd.f32 %v61, %v281
  %v283 = vpop.f32.mrf.mxu0
  %284 = vmatprep.mubr.f32.mxu0 0.0
  %285 = vmatmul.mubr.f32.gmra.mxu0 %v101
  %v286 = vpop.f32.mrf.mxu0
  %v287 = vadd.f32 %v61, %v286
  %v288 = vpop.f32.mrf.mxu0
  %289 = vmatprep.mubr.f32.mxu0 0.0
  %290 = vmatmul.mubr.f32.gmra.mxu0 %v104
  %v291 = vpop.f32.mrf.mxu0
  %v292 = vadd.f32 %v61, %v291
  %v293 = vpop.f32.mrf.mxu0
  %294 = vmatprep.mubr.f32.mxu0 0.0
  %295 = vmatmul.mubr.f32.gmra.mxu0 %v107
  %v296 = vpop.f32.mrf.mxu0
  %v297 = vadd.f32 %v61, %v296
  %v298 = vpop.f32.mrf.mxu0
  %299 = vmatprep.mubr.f32.mxu0 0.0
  %300 = vmatmul.mubr.f32.gmra.mxu0 %v110
  %v301 = vpop.f32.mrf.mxu0
  %v302 = vadd.f32 %v61, %v301
  %v303 = vpop.f32.mrf.mxu0
  %304 = vmatprep.mubr.f32.mxu0 0.0
  %305 = vmatmul.mubr.f32.gmra.mxu0 %v113
  %v306 = vpop.f32.mrf.mxu0
  %v307 = vadd.f32 %v61, %v306
  %v308 = vpop.f32.mrf.mxu0
  %309 = vmatprep.mubr.f32.mxu0 0.0
  %310 = vmatmul.mubr.f32.gmra.mxu0 %v116
  %v311 = vpop.f32.mrf.mxu0
  %v312 = vadd.f32 %v61, %v311
  %v313 = vpop.f32.mrf.mxu0
  %314 = vmatprep.mubr.f32.mxu0 0.0
  %315 = vmatmul.mubr.f32.gmra.mxu0 %v119
  %v316 = vpop.f32.mrf.mxu0
  %v317 = vadd.f32 %v61, %v316
  %v318 = vpop.f32.mrf.mxu0
  %319 = vmatprep.mubr.f32.mxu0 0.0
  %320 = vmatmul.mubr.f32.gmra.mxu0 %v122
  %v321 = vpop.f32.mrf.mxu0
  %v322 = vadd.f32 %v61, %v321
  %v323 = vpop.f32.mrf.mxu0
  %324 = vmatprep.mubr.f32.mxu0 0.0
  %325 = vmatmul.mubr.f32.gmra.mxu0 %v125
  %v326 = vpop.f32.mrf.mxu0
  %v327 = vadd.f32 %v61, %v326
  %v328 = vpop.f32.mrf.mxu0
  %329 = vmatprep.mubr.f32.mxu0 0.0
  %330 = vmatmul.mubr.f32.gmra.mxu0 %v128
  %v331 = vpop.f32.mrf.mxu0
  %v332 = vadd.f32 %v61, %v331
  %v333 = vpop.f32.mrf.mxu0
  %334 = vmatprep.mubr.f32.mxu0 0.0
  %335 = vmatmul.mubr.f32.gmra.mxu0 %v131
  %v336 = vpop.f32.mrf.mxu0
  %v337 = vadd.f32 %v61, %v336
  %v338 = vpop.f32.mrf.mxu0
  %339 = vmatprep.mubr.f32.mxu0 0.0
  %340 = vmatmul.mubr.f32.gmra.mxu0 %v134
  %v341 = vpop.f32.mrf.mxu0
  %v342 = vadd.f32 %v61, %v341
  %v343 = vpop.f32.mrf.mxu0
  %344 = vmatprep.mubr.f32.mxu0 0.0
  %345 = vmatmul.mubr.f32.gmra.mxu0 %v137
  %v346 = vpop.f32.mrf.mxu0
  %v347 = vadd.f32 %v61, %v346
  %v348 = vpop.f32.mrf.mxu0
  %349 = vmatprep.mubr.f32.mxu0 0.0
  %350 = vmatmul.mubr.f32.gmra.mxu0 %v140
  %v351 = vpop.f32.mrf.mxu0
  %v352 = vadd.f32 %v61, %v351
  %v353 = vpop.f32.mrf.mxu0
  %354 = vmatprep.mubr.f32.mxu0 0.0
  %355 = vmatmul.mubr.f32.gmra.mxu0 %v143
  %v356 = vpop.f32.mrf.mxu0
  %v357 = vadd.f32 %v61, %v356
  %v358 = vpop.f32.mrf.mxu0
  %359 = vmatprep.mubr.f32.mxu0 0.0
  %360 = vmatmul.mubr.f32.gmra.mxu0 %v146
  %v361 = vpop.f32.mrf.mxu0
  %v362 = vadd.f32 %v61, %v361
  %v363 = vpop.f32.mrf.mxu0
  %364 = vmatprep.mubr.f32.mxu0 0.0
  %365 = vmatmul.mubr.f32.gmra.mxu0 %v149
  %v366 = vpop.f32.mrf.mxu0
  %v367 = vadd.f32 %v61, %v366
  %v368 = vpop.f32.mrf.mxu0
  %369 = vmatprep.mubr.f32.mxu0 0.0
  %370 = vmatmul.mubr.f32.gmra.mxu0 %v152
  %v371 = vpop.f32.mrf.mxu0
  %v372 = vadd.f32 %v61, %v371
  %v373 = vpop.f32.mrf.mxu0
  %374 = vmatprep.mubr.f32.mxu0 0.0
  %375 = vmatmul.mubr.f32.gmra.mxu0 %v155
  %v376 = vpop.f32.mrf.mxu0
  %v377 = vadd.f32 %v61, %v376
  %v378 = vpop.f32.mrf.mxu0
  %379 = vmatprep.mubr.f32.mxu0 0.0
  %380 = vmatmul.mubr.f32.gmra.mxu0 %v158
  %v381 = vpop.f32.mrf.mxu0
  %v382 = vadd.f32 %v61, %v381
  %v383 = vpop.f32.mrf.mxu0
  %384 = vdwg.mxu0
  %v385 = vmax.f32 %v227, 0.0
  %v386 = vmax.f32 %v232, 0.0
  %v387 = vmax.f32 %v237, 0.0
  %v388 = vmax.f32 %v242, 0.0
  %v389 = vmax.f32 %v247, 0.0
  %v390 = vmax.f32 %v252, 0.0
  %v391 = vmax.f32 %v257, 0.0
  %v392 = vmax.f32 %v262, 0.0
  %v393 = vmax.f32 %v267, 0.0
  %v394 = vmax.f32 %v272, 0.0
  %v395 = vmax.f32 %v277, 0.0
  %v396 = vmax.f32 %v282, 0.0
  %v397 = vmax.f32 %v287, 0.0
  %v398 = vmax.f32 %v292, 0.0
  %v399 = vmax.f32 %v297, 0.0
  %v400 = vmax.f32 %v302, 0.0
  %v401 = vmax.f32 %v307, 0.0
  %v402 = vmax.f32 %v312, 0.0
  %v403 = vmax.f32 %v317, 0.0
  %v404 = vmax.f32 %v322, 0.0
  %v405 = vmax.f32 %v327, 0.0
  %v406 = vmax.f32 %v332, 0.0
  %v407 = vmax.f32 %v337, 0.0
  %v408 = vmax.f32 %v342, 0.0
  %v409 = vmax.f32 %v347, 0.0
  %v410 = vmax.f32 %v352, 0.0
  %v411 = vmax.f32 %v357, 0.0
  %v412 = vmax.f32 %v362, 0.0
  %v413 = vmax.f32 %v367, 0.0
  %v414 = vmax.f32 %v372, 0.0
  %v415 = vmax.f32 %v377, 0.0
  %v416 = vmax.f32 %v382, 0.0
  %v417 = vld [vmem:[%s3] sm:$0xff]
  %v418 = vld [vmem:[%s3 + $0x8] sm:$0xff]
  %v419 = vld [vmem:[%s3 + $0x10] sm:$0xff]
  %v420 = vld [vmem:[%s3 + $0x18] sm:$0xff]
  %v421 = vld [vmem:[%s3 + $0x20] sm:$0xff]
  %v422 = vld [vmem:[%s3 + $0x28] sm:$0xff]
  %v423 = vld [vmem:[%s3 + $0x30] sm:$0xff]
  %v424 = vld [vmem:[%s3 + $0x38] sm:$0xff]
  %v425 = vld [vmem:[%s3 + $0x40] sm:$0xff]
  %v426 = vld [vmem:[%s3 + $0x48] sm:$0xff]
  %v427 = vld [vmem:[%s3 + $0x50] sm:$0xff]
  %v428 = vld [vmem:[%s3 + $0x58] sm:$0xff]
  %v429 = vld [vmem:[%s3 + $0x60] sm:$0xff]
  %v430 = vld [vmem:[%s3 + $0x68] sm:$0xff]
  %v431 = vld [vmem:[%s3 + $0x70] sm:$0xff]
  %v432 = vld [vmem:[%s3 + $0x78] sm:$0xff]
  %v433 = vld [vmem:[%s4] sm:$0x1]
  %v435 = vlaneseq
  %v436 = vshrl.u32 %v435, 7
  %v437 = vsub.s32 0, %v436
  %v438 = vrot.slane %v433, %v437
  %440 = vmatprep.subr.mxu0 0.0
  %441 = vmatpush1.msra.mxu0 %v432
  %442 = vmatprep.subr.mxu0 0.0
  %443 = vmatpush1.msra.mxu0 %v431
  %444 = vmatprep.subr.mxu0 0.0
  %445 = vmatpush1.msra.mxu0 %v430
  %446 = vmatprep.subr.mxu0 0.0
  %447 = vmatpush1.msra.mxu0 %v429
  %448 = vmatprep.subr.mxu0 0.0
  %449 = vmatpush1.msra.mxu0 %v428
  %450 = vmatprep.subr.mxu0 0.0
  %451 = vmatpush1.msra.mxu0 %v427
  %452 = vmatprep.subr.mxu0 0.0
  %453 = vmatpush1.msra.mxu0 %v426
  %454 = vmatprep.subr.mxu0 0.0
  %455 = vmatpush1.msra.mxu0 %v425
  %456 = vmatprep.subr.mxu0 0.0
  %457 = vmatpush1.msra.mxu0 %v424
  %458 = vmatprep.subr.mxu0 0.0
  %459 = vmatpush1.msra.mxu0 %v423
  %460 = vmatprep.subr.mxu0 0.0
  %461 = vmatpush1.msra.mxu0 %v422
  %462 = vmatprep.subr.mxu0 0.0
  %463 = vmatpush1.msra.mxu0 %v421
  %464 = vmatprep.subr.mxu0 0.0
  %465 = vmatpush1.msra.mxu0 %v420
  %466 = vmatprep.subr.mxu0 0.0
  %467 = vmatpush1.msra.mxu0 %v419
  %468 = vmatprep.subr.mxu0 0.0
  %469 = vmatpush1.msra.mxu0 %v418
  %470 = vmatprep.subr.mxu0 0.0
  %471 = vmatpush1.msra.mxu0 %v417
  %472 = vmatprep.subr.mxu0 0.0
  %473 = vmatpush2.msra.mxu0 0.0
  %474 = vmatprep.subr.mxu0 0.0
  %475 = vmatpush2.msra.mxu0 0.0
  %476 = vmatprep.subr.mxu0 0.0
  %477 = vmatpush2.msra.mxu0 0.0
  %478 = vmatprep.subr.mxu0 0.0
  %479 = vmatpush2.msra.mxu0 0.0
  %480 = vmatprep.subr.mxu0 0.0
  %481 = vmatpush2.msra.mxu0 0.0
  %482 = vmatprep.subr.mxu0 0.0
  %483 = vmatpush2.msra.mxu0 0.0
  %484 = vmatprep.subr.mxu0 0.0
  %485 = vmatpush2.msra.mxu0 0.0
  %486 = vmatprep.subr.mxu0 0.0
  %487 = vmatpush2.msra.mxu0 0.0
  %488 = vmatprep.subr.mxu0 0.0
  %489 = vmatpush2.msra.mxu0 0.0
  %490 = vmatprep.subr.mxu0 0.0
  %491 = vmatpush2.msra.mxu0 0.0
  %492 = vmatprep.subr.mxu0 0.0
  %493 = vmatpush2.msra.mxu0 0.0
  %494 = vmatprep.subr.mxu0 0.0
  %495 = vmatpush2.msra.mxu0 0.0
  %496 = vmatprep.subr.mxu0 0.0
  %497 = vmatpush2.msra.mxu0 0.0
  %498 = vmatprep.subr.mxu0 0.0
  %499 = vmatpush2.msra.mxu0 0.0
  %500 = vmatprep.subr.mxu0 0.0
  %501 = vmatpush2.msra.mxu0 0.0
  %502 = vmatprep.subr.mxu0 0.0
  %503 = vmatpush2.msra.mxu0 0.0
  %504 = vmatprep.mubr.f32.mxu0 0.0
  %505 = vmatmul.mubr.f32.gmra.mxu0 %v385
  %v506 = vpop.f32.mrf.mxu0
  %v507 = vadd.f32 %v438, %v506
  %v508 = vpop.f32.mrf.mxu0
  %509 = vmatprep.mubr.f32.mxu0 0.0
  %510 = vmatmul.mubr.f32.gmra.mxu0 %v386
  %v511 = vpop.f32.mrf.mxu0
  %v512 = vadd.f32 %v438, %v511
  %v513 = vpop.f32.mrf.mxu0
  %514 = vmatprep.mubr.f32.mxu0 0.0
  %515 = vmatmul.mubr.f32.gmra.mxu0 %v387
  %v516 = vpop.f32.mrf.mxu0
  %v517 = vadd.f32 %v438, %v516
  %v518 = vpop.f32.mrf.mxu0
  %519 = vmatprep.mubr.f32.mxu0 0.0
  %520 = vmatmul.mubr.f32.gmra.mxu0 %v388
  %v521 = vpop.f32.mrf.mxu0
  %v522 = vadd.f32 %v438, %v521
  %v523 = vpop.f32.mrf.mxu0
  %524 = vmatprep.mubr.f32.mxu0 0.0
  %525 = vmatmul.mubr.f32.gmra.mxu0 %v389
  %v526 = vpop.f32.mrf.mxu0
  %v527 = vadd.f32 %v438, %v526
  %v528 = vpop.f32.mrf.mxu0
  %529 = vmatprep.mubr.f32.mxu0 0.0
  %530 = vmatmul.mubr.f32.gmra.mxu0 %v390
  %v531 = vpop.f32.mrf.mxu0
  %v532 = vadd.f32 %v438, %v531
  %v533 = vpop.f32.mrf.mxu0
  %534 = vmatprep.mubr.f32.mxu0 0.0
  %535 = vmatmul.mubr.f32.gmra.mxu0 %v391
  %v536 = vpop.f32.mrf.mxu0
  %v537 = vadd.f32 %v438, %v536
  %v538 = vpop.f32.mrf.mxu0
  %539 = vmatprep.mubr.f32.mxu0 0.0
  %540 = vmatmul.mubr.f32.gmra.mxu0 %v392
  %v541 = vpop.f32.mrf.mxu0
  %v542 = vadd.f32 %v438, %v541
  %v543 = vpop.f32.mrf.mxu0
  %544 = vmatprep.mubr.f32.mxu0 0.0
  %545 = vmatmul.mubr.f32.gmra.mxu0 %v393
  %v546 = vpop.f32.mrf.mxu0
  %v547 = vadd.f32 %v438, %v546
  %v548 = vpop.f32.mrf.mxu0
  %549 = vmatprep.mubr.f32.mxu0 0.0
  %550 = vmatmul.mubr.f32.gmra.mxu0 %v394
  %v551 = vpop.f32.mrf.mxu0
  %v552 = vadd.f32 %v438, %v551
  %v553 = vpop.f32.mrf.mxu0
  %554 = vmatprep.mubr.f32.mxu0 0.0
  %555 = vmatmul.mubr.f32.gmra.mxu0 %v395
  %v556 = vpop.f32.mrf.mxu0
  %v557 = vadd.f32 %v438, %v556
  %v558 = vpop.f32.mrf.mxu0
  %559 = vmatprep.mubr.f32.mxu0 0.0
  %560 = vmatmul.mubr.f32.gmra.mxu0 %v396
  %v561 = vpop.f32.mrf.mxu0
  %v562 = vadd.f32 %v438, %v561
  %v563 = vpop.f32.mrf.mxu0
  %564 = vmatprep.mubr.f32.mxu0 0.0
  %565 = vmatmul.mubr.f32.gmra.mxu0 %v397
  %v566 = vpop.f32.mrf.mxu0
  %v567 = vadd.f32 %v438, %v566
  %v568 = vpop.f32.mrf.mxu0
  %569 = vmatprep.mubr.f32.mxu0 0.0
  %570 = vmatmul.mubr.f32.gmra.mxu0 %v398
  %v571 = vpop.f32.mrf.mxu0
  %v572 = vadd.f32 %v438, %v571
  %v573 = vpop.f32.mrf.mxu0
  %574 = vmatprep.mubr.f32.mxu0 0.0
  %575 = vmatmul.mubr.f32.gmra.mxu0 %v399
  %v576 = vpop.f32.mrf.mxu0
  %v577 = vadd.f32 %v438, %v576
  %v578 = vpop.f32.mrf.mxu0
  %579 = vmatprep.mubr.f32.mxu0 0.0
  %580 = vmatmul.mubr.f32.gmra.mxu0 %v400
  %v581 = vpop.f32.mrf.mxu0
  %v582 = vadd.f32 %v438, %v581
  %v583 = vpop.f32.mrf.mxu0
  %584 = vmatprep.mubr.f32.mxu0 0.0
  %585 = vmatmul.mubr.f32.gmra.mxu0 %v401
  %v586 = vpop.f32.mrf.mxu0
  %v587 = vadd.f32 %v438, %v586
  %v588 = vpop.f32.mrf.mxu0
  %589 = vmatprep.mubr.f32.mxu0 0.0
  %590 = vmatmul.mubr.f32.gmra.mxu0 %v402
  %v591 = vpop.f32.mrf.mxu0
  %v592 = vadd.f32 %v438, %v591
  %v593 = vpop.f32.mrf.mxu0
  %594 = vmatprep.mubr.f32.mxu0 0.0
  %595 = vmatmul.mubr.f32.gmra.mxu0 %v403
  %v596 = vpop.f32.mrf.mxu0
  %v597 = vadd.f32 %v438, %v596
  %v598 = vpop.f32.mrf.mxu0
  %599 = vmatprep.mubr.f32.mxu0 0.0
  %600 = vmatmul.mubr.f32.gmra.mxu0 %v404
  %v601 = vpop.f32.mrf.mxu0
  %v602 = vadd.f32 %v438, %v601
  %v603 = vpop.f32.mrf.mxu0
  %604 = vmatprep.mubr.f32.mxu0 0.0
  %605 = vmatmul.mubr.f32.gmra.mxu0 %v405
  %v606 = vpop.f32.mrf.mxu0
  %v607 = vadd.f32 %v438, %v606
  %v608 = vpop.f32.mrf.mxu0
  %609 = vmatprep.mubr.f32.mxu0 0.0
  %610 = vmatmul.mubr.f32.gmra.mxu0 %v406
  %v611 = vpop.f32.mrf.mxu0
  %v612 = vadd.f32 %v438, %v611
  %v613 = vpop.f32.mrf.mxu0
  %614 = vmatprep.mubr.f32.mxu0 0.0
  %615 = vmatmul.mubr.f32.gmra.mxu0 %v407
  %v616 = vpop.f32.mrf.mxu0
  %v617 = vadd.f32 %v438, %v616
  %v618 = vpop.f32.mrf.mxu0
  %619 = vmatprep.mubr.f32.mxu0 0.0
  %620 = vmatmul.mubr.f32.gmra.mxu0 %v408
  %v621 = vpop.f32.mrf.mxu0
  %v622 = vadd.f32 %v438, %v621
  %v623 = vpop.f32.mrf.mxu0
  %624 = vmatprep.mubr.f32.mxu0 0.0
  %625 = vmatmul.mubr.f32.gmra.mxu0 %v409
  %v626 = vpop.f32.mrf.mxu0
  %v627 = vadd.f32 %v438, %v626
  %v628 = vpop.f32.mrf.mxu0
  %629 = vmatprep.mubr.f32.mxu0 0.0
  %630 = vmatmul.mubr.f32.gmra.mxu0 %v410
  %v631 = vpop.f32.mrf.mxu0
  %v632 = vadd.f32 %v438, %v631
  %v633 = vpop.f32.mrf.mxu0
  %634 = vmatprep.mubr.f32.mxu0 0.0
  %635 = vmatmul.mubr.f32.gmra.mxu0 %v411
  %v636 = vpop.f32.mrf.mxu0
  %v637 = vadd.f32 %v438, %v636
  %v638 = vpop.f32.mrf.mxu0
  %639 = vmatprep.mubr.f32.mxu0 0.0
  %640 = vmatmul.mubr.f32.gmra.mxu0 %v412
  %v641 = vpop.f32.mrf.mxu0
  %v642 = vadd.f32 %v438, %v641
  %v643 = vpop.f32.mrf.mxu0
  %644 = vmatprep.mubr.f32.mxu0 0.0
  %645 = vmatmul.mubr.f32.gmra.mxu0 %v413
  %v646 = vpop.f32.mrf.mxu0
  %v647 = vadd.f32 %v438, %v646
  %v648 = vpop.f32.mrf.mxu0
  %649 = vmatprep.mubr.f32.mxu0 0.0
  %650 = vmatmul.mubr.f32.gmra.mxu0 %v414
  %v651 = vpop.f32.mrf.mxu0
  %v652 = vadd.f32 %v438, %v651
  %v653 = vpop.f32.mrf.mxu0
  %654 = vmatprep.mubr.f32.mxu0 0.0
  %655 = vmatmul.mubr.f32.gmra.mxu0 %v415
  %v656 = vpop.f32.mrf.mxu0
  %v657 = vadd.f32 %v438, %v656
  %v658 = vpop.f32.mrf.mxu0
  %659 = vmatprep.mubr.f32.mxu0 0.0
  %660 = vmatmul.mubr.f32.gmra.mxu0 %v416
  %v661 = vpop.f32.mrf.mxu0
  %v662 = vadd.f32 %v438, %v661
  %v663 = vpop.f32.mrf.mxu0
  %664 = vdwg.mxu0
  %665 = vst [vmem:[%s5] sm:$0xff] %v507
  %666 = vst [vmem:[%s5 + $0x8] sm:$0xff] %v512
  %667 = vst [vmem:[%s5 + $0x10] sm:$0xff] %v517
  %668 = vst [vmem:[%s5 + $0x18] sm:$0xff] %v522
  %669 = vst [vmem:[%s5 + $0x20] sm:$0xff] %v527
  %670 = vst [vmem:[%s5 + $0x28] sm:$0xff] %v532
  %671 = vst [vmem:[%s5 + $0x30] sm:$0xff] %v537
  %672 = vst [vmem:[%s5 + $0x38] sm:$0xff] %v542
  %673 = vst [vmem:[%s5 + $0x40] sm:$0xff] %v547
  %674 = vst [vmem:[%s5 + $0x48] sm:$0xff] %v552
  %675 = vst [vmem:[%s5 + $0x50] sm:$0xff] %v557
  %676 = vst [vmem:[%s5 + $0x58] sm:$0xff] %v562
  %677 = vst [vmem:[%s5 + $0x60] sm:$0xff] %v567
  %678 = vst [vmem:[%s5 + $0x68] sm:$0xff] %v572
  %679 = vst [vmem:[%s5 + $0x70] sm:$0xff] %v577
  %680 = vst [vmem:[%s5 + $0x78] sm:$0xff] %v582
  %681 = vst [vmem:[%s5 + $0x80] sm:$0xff] %v587
  %682 = vst [vmem:[%s5 + $0x88] sm:$0xff] %v592
  %683 = vst [vmem:[%s5 + $0x90] sm:$0xff] %v597
  %684 = vst [vmem:[%s5 + $0x98] sm:$0xff] %v602
  %685 = vst [vmem:[%s5 + $0xa0] sm:$0xff] %v607
  %686 = vst [vmem:[%s5 + $0xa8] sm:$0xff] %v612
  %687 = vst [vmem:[%s5 + $0xb0] sm:$0xff] %v617
  %688 = vst [vmem:[%s5 + $0xb8] sm:$0xff] %v622
  %689 = vst [vmem:[%s5 + $0xc0] sm:$0xff] %v627
  %690 = vst [vmem:[%s5 + $0xc8] sm:$0xff] %v632
  %691 = vst [vmem:[%s5 + $0xd0] sm:$0xff] %v637
  %692 = vst [vmem:[%s5 + $0xd8] sm:$0xff] %v642
  %693 = vst [vmem:[%s5 + $0xe0] sm:$0xff] %v647
  %694 = vst [vmem:[%s5 + $0xe8] sm:$0xff] %v652
  %695 = vst [vmem:[%s5 + $0xf0] sm:$0xff] %v657
  %696 = vst [vmem:[%s5 + $0xf8] sm:$0xff] %v662
  // Predicated region
  $region22: #{_psy_forward_impl.1} parent=0 // pred_check
    _
  $region23: #{_psy_forward_impl.1} parent=0 // pred_check_branch
    %698 = sbr.rel (0) target = $region25
  $region24: #{_psy_forward_impl.1} parent=0 // pred_region
    _
  $region25: #{_psy_forward_impl.1} parent=0 // pred_fallthru
    _
  // Predicated region
  $region26: #{_psy_forward_impl.1} parent=0 // pred_check
    _
  $region27: #{_psy_forward_impl.1} parent=0 // pred_check_branch
    %700 = sbr.rel (0) target = $region29
  $region28: #{_psy_forward_impl.1} parent=0 // pred_region
    _
  $region29: #{_psy_forward_impl.1} parent=0 // pred_fallthru
    _

</llo_original>
